<compile_context>
chip_gen: v7x
topology: tpu7x:2x2x1
jax: 0.10.0
libtpu: 0.0.40
codegen_flags: <defaults>
</compile_context>

<pallas_src>
import functools

import jax
import jax.numpy as jnp
from jax.experimental import pallas as pl
from jax.experimental.pallas import tpu as pltpu

EPS = 1e-5  # PyTorch nn.LayerNorm default


def _round_up(x, m):
    return (x + m - 1) // m * m


def _vmem_capacity_bytes():
    """Physical VMEM per TensorCore; conservative v7x default if unknown."""
    try:
        return int(pltpu.get_tpu_info().vmem_capacity_bytes)
    except Exception:
        return 64 << 20


def _prenorm_linear_residual_kernel(x_ref, *rest, true_dim, eps, padded_d,
                                    split_n, tile_n, res_from_x):
    # Argument layout:
    #   split_n and not res_from_x: (x, residual_cols, gamma, beta, w, b, out, y_scratch)
    #   split_n and res_from_x    : (x, gamma, beta, w, b, out, y_scratch)
    #   not split_n               : (x, gamma, beta, w, b, out)
    if split_n and not res_from_x:
        res_ref, *rest = rest
    else:
        res_ref = None
    gamma_ref, beta_ref, w_ref, b_ref, o_ref, *scratch = rest

    def layernorm_f32():
        xf = x_ref[...].astype(jnp.float32)                  # (tile_m, Dp)
        inv_d = 1.0 / true_dim                               # padded cols are 0
        mean = jnp.sum(xf, axis=-1, keepdims=True) * inv_d
        xc = xf - mean                                        # two-pass variance
        if padded_d:
            # Padded columns would contribute mean^2 to the variance; mask them.
            col = jax.lax.broadcasted_iota(jnp.int32, xf.shape, 1)
            xc_var = jnp.where(col < true_dim, xc, 0.0)
        else:
            xc_var = xc
        var = jnp.sum(xc_var * xc_var, axis=-1, keepdims=True) * inv_d
        inv = jax.lax.rsqrt(var + eps)                        # EUP
        # gamma/beta are zero-padded -> padded feature columns of y are 0.
        return (xc * inv * gamma_ref[...].astype(jnp.float32)
                + beta_ref[...].astype(jnp.float32))

    if split_n:
        # LayerNorm computed ONCE per token tile (j == 0), reused for every
        # weight-column block.  Scratch holds y in the matmul dtype.
        y_ref = scratch[0]

        @pl.when(pl.program_id(1) == 0)
        def _():
            y_ref[...] = layernorm_f32().astype(y_ref.dtype)

        y = y_ref[...]
    else:
        y = layernorm_f32().astype(w_ref.dtype)

    # fn = Linear(dim, dim): MXU matmul in the weight's dtype, f32 accumulation.
    out = jnp.dot(y, w_ref[...], preferred_element_type=jnp.float32)
    out = out + b_ref[...].astype(jnp.float32)

    # Residual add in f32.
    if not split_n:
        res = x_ref[...].astype(jnp.float32)
    elif res_ref is not None:
        res = res_ref[...].astype(jnp.float32)
    else:
        # 128-aligned dynamic lane slice of the resident x tile (no extra
        # HBM stream, whole-vreg selection).
        off = pl.multiple_of(pl.program_id(1) * tile_n, 128)
        res = x_ref[:, pl.ds(off, tile_n)].astype(jnp.float32)

    o_ref[...] = (out + res).astype(o_ref.dtype)


def prenorm_residual(x, gamma, beta, w, b, *, tile_m=None, tile_n=None, eps=EPS):
    """Fused  LayerNorm(x) @ w + b + x.

    x: (B, S, D). gamma/beta: (D,). w: (D, D) laid out (in, out). b: (D,).
    tile_m: token tile; default 512 on 128-MiB-VMEM chips (v5e/v6e), else 256.
    tile_n: optional weight-output-column tile (multiple of 128; use >=256 on
            v6e/v7x to fill the 256-wide MXU).  Default = full weight resident.
    For best MXU throughput pass bf16 weights (f32 weights use the emulated
    f32 MXU path, ~3-6x slower).
    """
    B, S, D = x.shape
    N = B * S
    out_dtype = x.dtype

    vmem_cap = _vmem_capacity_bytes()
    cap_limit = int(vmem_cap * 85 // 100)       # headroom for compiler temps

    # Lane-dense feature dim (multiple of 128).
    Dp = _round_up(D, 128)
    if tile_n is None:
        tile_n = Dp
    assert tile_n % 128 == 0 and Dp % tile_n == 0, "tile_n must tile Dp in 128s"
    split_n = tile_n != Dp

    # Token tile: big (amortize per-step overhead / feed MXU M-dim), clamped
    # for tiny inputs.
    if tile_m is None:
        tile_m = 512 if vmem_cap >= (96 << 20) else 256
    tile_m = _round_up(min(tile_m, _round_up(N, 8)), 8)
    Np = _round_up(N, tile_m)
    # v7x has 2 TensorCores: guarantee >= 2 steps along the "parallel" axis.
    if Np // tile_m == 1 and not split_n and tile_m >= 16:
        tile_m = _round_up(tile_m // 2, 8)
        Np = _round_up(N, tile_m)

    grid = (Np // tile_m, Dp // tile_n)
    padded_d = Dp != D

    # Zero-pad only when needed (padding x is an extra full HBM pass).
    x2 = x.reshape(N, D)
    if Np != N or padded_d:
        x2 = jnp.pad(x2, ((0, Np - N), (0, Dp - D)))
    if padded_d:
        gamma2 = jnp.pad(gamma, (0, Dp - D)).reshape(1, Dp)
        beta2 = jnp.pad(beta, (0, Dp - D)).reshape(1, Dp)
        w2 = jnp.pad(w, ((0, Dp - D), (0, Dp - D)))
        b2 = jnp.pad(b, (0, Dp - D)).reshape(1, Dp)
    else:
        gamma2 = gamma.reshape(1, Dp)
        beta2 = beta.reshape(1, Dp)
        w2 = w
        b2 = b.reshape(1, Dp)

    xb = jnp.dtype(x2.dtype).itemsize
    wb = jnp.dtype(w2.dtype).itemsize
    ob = jnp.dtype(out_dtype).itemsize

    def run(optimized):
        single_buf = optimized          # Buffered(1) on grid-invariant specs
        res_from_x = optimized          # residual sliced from resident x tile
        w_bufs = 1 if (single_buf and not split_n) else 2

        # VMEM budget: pipelined tiles + weight block + f32 LN temporaries.
        est = (2 * tile_m * Dp * xb                      # x tiles (double-buffered)
               + 2 * tile_m * tile_n * ob                # out tiles
               + w_bufs * Dp * tile_n * wb               # weight block(s)
               + 8 * Dp * 4                              # gamma/beta/bias
               + (tile_m * Dp * wb if split_n else 0)    # y scratch
               + ((2 * tile_m * tile_n * xb)
                  if (split_n and not res_from_x) else 0)  # extra residual stream
               + 3 * tile_m * Dp * 4                     # f32 temps (xf, xc, sq)
               + (4 << 20))                              # slack
        vmem_limit = int(min(max(est, 32 << 20), cap_limit))

        def spec(shape, index_map, invariant):
            if single_buf and invariant:
                return pl.BlockSpec(shape, index_map, pipeline_mode=pl.Buffered(1))
            return pl.BlockSpec(shape, index_map)

        in_specs = [pl.BlockSpec((tile_m, Dp), lambda i, j: (i, 0))]   # x (LN rows)
        inputs = [x2]
        if split_n and not res_from_x:
            # Conservative fallback: residual columns as a second input stream.
            in_specs.append(pl.BlockSpec((tile_m, tile_n), lambda i, j: (i, j)))
            inputs.append(x2)
        in_specs += [
            spec((1, Dp), lambda i, j: (0, 0), True),             # gamma
            spec((1, Dp), lambda i, j: (0, 0), True),             # beta
            spec((Dp, tile_n), lambda i, j: (0, j), not split_n),  # weight cols
            spec((1, tile_n), lambda i, j: (0, j), not split_n),   # bias cols
        ]
        inputs += [gamma2, beta2, w2, b2]

        scratch_shapes = [pltpu.VMEM((tile_m, Dp), w2.dtype)] if split_n else []

        kernel = functools.partial(
            _prenorm_linear_residual_kernel,
            true_dim=D, eps=eps, padded_d=padded_d,
            split_n=split_n, tile_n=tile_n, res_from_x=res_from_x)

        return pl.pallas_call(
            kernel,
            out_shape=jax.ShapeDtypeStruct((Np, Dp), out_dtype),
            grid_spec=pltpu.PrefetchScalarGridSpec(
                num_scalar_prefetch=0,
                grid=grid,
                in_specs=in_specs,
                out_specs=pl.BlockSpec((tile_m, tile_n), lambda i, j: (i, j)),
                scratch_shapes=scratch_shapes),
            compiler_params=pltpu.CompilerParams(
                # j carries the LN scratch within a token tile -> "arbitrary";
                # i is independent -> "parallel" (megacore sharding on v7x).
                dimension_semantics=("parallel", "arbitrary"),
                vmem_limit_bytes=vmem_limit),
        )(*inputs)

    try:
        out = run(optimized=True)
    except Exception:
        # Portability fallback: no Buffered(1), residual via a second input.
        out = run(optimized=False)

    if Np != N or padded_d:
        out = out[:N, :D]
    return out.reshape(B, S, D)


def reference(x, gamma, beta, w, b, eps=EPS):
    xf = x.astype(jnp.float32)
    mean = jnp.mean(xf, axis=-1, keepdims=True)
    var = jnp.mean((xf - mean) ** 2, axis=-1, keepdims=True)
    xn = (xf - mean) * jax.lax.rsqrt(var + eps)
    y = xn * gamma.astype(jnp.float32) + beta.astype(jnp.float32)
    return y @ w.astype(jnp.float32) + b.astype(jnp.float32) + xf


if __name__ == "__main__":
    keys = jax.random.split(jax.random.PRNGKey(0), 10)

    # --- case 1: small f32 shapes (token/feature padding, resident weight) --
    B, S, D = 2, 8, 32
    x = jax.random.normal(keys[0], (B, S, D), dtype=jnp.float32)
    gamma = 1.0 + 0.1 * jax.random.normal(keys[1], (D,), dtype=jnp.float32)
    beta = 0.01 * jax.random.normal(keys[2], (D,), dtype=jnp.float32)
    w = jax.random.normal(keys[3], (D, D), dtype=jnp.float32) / jnp.sqrt(D)
    b = 0.01 * jax.random.normal(keys[4], (D,), dtype=jnp.float32)

    out = jax.block_until_ready(prenorm_residual(x, gamma, beta, w, b))
    ref = reference(x, gamma, beta, w, b)
    assert out.shape == (B, S, D)
    assert jnp.allclose(out, ref, atol=2e-4, rtol=2e-4), "f32 mismatch vs reference"

    # --- case 2: bf16 + weight-column tiling with MXU-wide tile_n=256 -------
    B, S, D = 2, 16, 512
    x = jax.random.normal(keys[5], (B, S, D), dtype=jnp.float32).astype(jnp.bfloat16)
    gamma = 1.0 + 0.1 * jax.random.normal(keys[6], (D,), dtype=jnp.float32)
    beta = 0.01 * jax.random.normal(keys[7], (D,), dtype=jnp.float32)
    w = (jax.random.normal(keys[8], (D, D), dtype=jnp.float32)
         / jnp.sqrt(D)).astype(jnp.bfloat16)
    b = 0.01 * jax.random.normal(keys[9], (D,), dtype=jnp.float32)

    out = jax.block_until_ready(prenorm_residual(x, gamma, beta, w, b, tile_n=256))
    ref = reference(x, gamma, beta, w, b)
    assert out.shape == (B, S, D)
    assert jnp.allclose(out.astype(jnp.float32), ref, atol=5e-2, rtol=5e-2), \
        "bf16 mismatch vs reference"

    print("KERNEL_OK")
</pallas_src>

<mosaic_0001>
module attributes {stable_mosaic.version = 11 : i64} {
  func.func @_prenorm_linear_residual_kernel(%arg0: i32, %arg1: i32, %arg2: memref<8x128xf32, #tpu.memory_space<vmem>>, %arg3: memref<1x128xf32, #tpu.memory_space<vmem>>, %arg4: memref<1x128xf32, #tpu.memory_space<vmem>>, %arg5: memref<128x128xf32, #tpu.memory_space<vmem>>, %arg6: memref<1x128xf32, #tpu.memory_space<vmem>>, %arg7: memref<8x128xf32, #tpu.memory_space<vmem>>) attributes {dimension_semantics = [#tpu.dimension_semantics<parallel>, #tpu.dimension_semantics<arbitrary>], iteration_bounds = array<i64: 2, 1>, scalar_prefetch = 0 : i64, scratch_operands = 0 : i64, tpu.core_type = #tpu.core_type<tc>, window_params = [{transform_indices = @transform_0, window_bounds = array<i64: 8, 128>}, {pipeline_mode = #tpu.pipeline_mode<synchronous>, transform_indices = @transform_1, window_bounds = array<i64: 1, 128>}, {pipeline_mode = #tpu.pipeline_mode<synchronous>, transform_indices = @transform_2, window_bounds = array<i64: 1, 128>}, {pipeline_mode = #tpu.pipeline_mode<synchronous>, transform_indices = @transform_3, window_bounds = array<i64: 128, 128>}, {pipeline_mode = #tpu.pipeline_mode<synchronous>, transform_indices = @transform_4, window_bounds = array<i64: 1, 128>}, {transform_indices = @transform_5, window_bounds = array<i64: 8, 128>}]} {
    %c0 = arith.constant 0 : index
    %c0_0 = arith.constant 0 : index
    %0 = vector.load %arg2[%c0, %c0_0] : memref<8x128xf32, #tpu.memory_space<vmem>>, vector<8x128xf32>
    %cst = arith.constant dense<0.000000e+00> : vector<8xf32>
    %1 = vector.multi_reduction <add>, %0, %cst [1] : vector<8x128xf32> to vector<8xf32>
    %2 = vector.shape_cast %1 : vector<8xf32> to vector<8x1xf32>
    %cst_1 = arith.constant 3.125000e-02 : f32
    %3 = vector.broadcast %cst_1 : f32 to vector<8x1xf32>
    %4 = arith.mulf %2, %3 : vector<8x1xf32>
    %5 = vector.broadcast %4 : vector<8x1xf32> to vector<8x128xf32>
    %6 = arith.subf %0, %5 : vector<8x128xf32>
    %7 = tpu.iota {dimensions = array<i32: 1>} : vector<8x128xi32>
    %c32_i32 = arith.constant 32 : i32
    %8 = vector.broadcast %c32_i32 : i32 to vector<8x128xi32>
    %9 = arith.cmpi slt, %7, %8 : vector<8x128xi32>
    %cst_2 = arith.constant 0.000000e+00 : f32
    %10 = vector.broadcast %cst_2 : f32 to vector<8x128xf32>
    %11 = arith.select %9, %6, %10 : vector<8x128xi1>, vector<8x128xf32>
    %12 = arith.mulf %11, %11 : vector<8x128xf32>
    %cst_3 = arith.constant dense<0.000000e+00> : vector<8xf32>
    %13 = vector.multi_reduction <add>, %12, %cst_3 [1] : vector<8x128xf32> to vector<8xf32>
    %14 = vector.shape_cast %13 : vector<8xf32> to vector<8x1xf32>
    %cst_4 = arith.constant 3.125000e-02 : f32
    %15 = vector.broadcast %cst_4 : f32 to vector<8x1xf32>
    %16 = arith.mulf %14, %15 : vector<8x1xf32>
    %cst_5 = arith.constant 9.99999974E-6 : f32
    %17 = vector.broadcast %cst_5 : f32 to vector<8x1xf32>
    %18 = arith.addf %16, %17 : vector<8x1xf32>
    %19 = math.rsqrt %18 : vector<8x1xf32>
    %20 = vector.broadcast %19 : vector<8x1xf32> to vector<8x128xf32>
    %21 = arith.mulf %6, %20 : vector<8x128xf32>
    %c0_6 = arith.constant 0 : index
    %c0_7 = arith.constant 0 : index
    %22 = vector.load %arg3[%c0_6, %c0_7] : memref<1x128xf32, #tpu.memory_space<vmem>>, vector<1x128xf32>
    %23 = vector.broadcast %22 : vector<1x128xf32> to vector<8x128xf32>
    %24 = arith.mulf %21, %23 : vector<8x128xf32>
    %c0_8 = arith.constant 0 : index
    %c0_9 = arith.constant 0 : index
    %25 = vector.load %arg4[%c0_8, %c0_9] : memref<1x128xf32, #tpu.memory_space<vmem>>, vector<1x128xf32>
    %26 = vector.broadcast %25 : vector<1x128xf32> to vector<8x128xf32>
    %27 = arith.addf %24, %26 : vector<8x128xf32>
    %c0_10 = arith.constant 0 : index
    %c0_11 = arith.constant 0 : index
    %28 = vector.load %arg5[%c0_10, %c0_11] : memref<128x128xf32, #tpu.memory_space<vmem>>, vector<128x128xf32>
    %cst_12 = arith.constant dense<0.000000e+00> : vector<8x128xf32>
    %29 = tpu.matmul %27, %28, %cst_12 {dimension_numbers = #tpu.dot_dimension_numbers<[1], [0], [0], [1], [0, 0, 1, 1], [], []>} : vector<8x128xf32>, vector<128x128xf32>, vector<8x128xf32> -> vector<8x128xf32>
    %c0_13 = arith.constant 0 : index
    %c0_14 = arith.constant 0 : index
    %30 = vector.load %arg6[%c0_13, %c0_14] : memref<1x128xf32, #tpu.memory_space<vmem>>, vector<1x128xf32>
    %31 = vector.broadcast %30 : vector<1x128xf32> to vector<8x128xf32>
    %32 = arith.addf %29, %31 : vector<8x128xf32>
    %c0_15 = arith.constant 0 : index
    %c0_16 = arith.constant 0 : index
    %33 = vector.load %arg2[%c0_15, %c0_16] : memref<8x128xf32, #tpu.memory_space<vmem>>, vector<8x128xf32>
    %34 = arith.addf %32, %33 : vector<8x128xf32>
    %c0_17 = arith.constant 0 : index
    %c0_18 = arith.constant 0 : index
    %35 = vector.load %arg7[%c0_17, %c0_18] : memref<8x128xf32, #tpu.memory_space<vmem>>, vector<8x128xf32>
    tpu.vector_store %arg7[%c0_17, %c0_18], %34 {strides = array<i32>} : memref<8x128xf32, #tpu.memory_space<vmem>>, vector<8x128xf32>,
    return
  }
  func.func @transform_0(%arg0: i32, %arg1: i32) -> (i32, i32) {
    %c0_i32 = arith.constant 0 : i32
    %c0_i32_0 = arith.constant 0 : i32
    return %arg0, %c0_i32 : i32, i32
  }
  func.func @transform_1(%arg0: i32, %arg1: i32) -> (i32, i32) {
    %c0_i32 = arith.constant 0 : i32
    %c0_i32_0 = arith.constant 0 : i32
    %c0_i32_1 = arith.constant 0 : i32
    return %c0_i32, %c0_i32_0 : i32, i32
  }
  func.func @transform_2(%arg0: i32, %arg1: i32) -> (i32, i32) {
    %c0_i32 = arith.constant 0 : i32
    %c0_i32_0 = arith.constant 0 : i32
    %c0_i32_1 = arith.constant 0 : i32
    return %c0_i32, %c0_i32_0 : i32, i32
  }
  func.func @transform_3(%arg0: i32, %arg1: i32) -> (i32, i32) {
    %c0_i32 = arith.constant 0 : i32
    %c0_i32_0 = arith.constant 0 : i32
    return %c0_i32, %arg1 : i32, i32
  }
  func.func @transform_4(%arg0: i32, %arg1: i32) -> (i32, i32) {
    %c0_i32 = arith.constant 0 : i32
    %c0_i32_0 = arith.constant 0 : i32
    return %c0_i32, %arg1 : i32, i32
  }
  func.func @transform_5(%arg0: i32, %arg1: i32) -> (i32, i32) {
    %c0_i32 = arith.constant 0 : i32
    return %arg0, %arg1 : i32, i32
  }
}

module attributes {stable_mosaic.version = 11 : i64} {
  func.func @_prenorm_linear_residual_kernel(%arg0: i32, %arg1: i32, %arg2: memref<8x128xf32, #tpu.memory_space<vmem>>, %arg3: memref<1x128xf32, #tpu.memory_space<vmem>>, %arg4: memref<1x128xf32, #tpu.memory_space<vmem>>, %arg5: memref<128x128xf32, #tpu.memory_space<vmem>>, %arg6: memref<1x128xf32, #tpu.memory_space<vmem>>, %arg7: memref<8x128xf32, #tpu.memory_space<vmem>>) attributes {dimension_semantics = [#tpu.dimension_semantics<parallel>, #tpu.dimension_semantics<arbitrary>], iteration_bounds = array<i64: 2, 1>, scalar_prefetch = 0 : i64, scratch_operands = 0 : i64, tpu.core_type = #tpu.core_type<tc>, window_params = [{transform_indices = @transform_0, window_bounds = array<i64: 8, 128>}, {pipeline_mode = #tpu.pipeline_mode<synchronous>, transform_indices = @transform_1, window_bounds = array<i64: 1, 128>}, {pipeline_mode = #tpu.pipeline_mode<synchronous>, transform_indices = @transform_2, window_bounds = array<i64: 1, 128>}, {transform_indices = @transform_3, window_bounds = array<i64: 128, 128>}, {transform_indices = @transform_4, window_bounds = array<i64: 1, 128>}, {transform_indices = @transform_5, window_bounds = array<i64: 8, 128>}]} {
    %c0 = arith.constant 0 : index
    %c0_0 = arith.constant 0 : index
    %0 = vector.load %arg2[%c0, %c0_0] : memref<8x128xf32, #tpu.memory_space<vmem>>, vector<8x128xf32>
    %cst = arith.constant dense<0.000000e+00> : vector<8xf32>
    %1 = vector.multi_reduction <add>, %0, %cst [1] : vector<8x128xf32> to vector<8xf32>
    %2 = vector.shape_cast %1 : vector<8xf32> to vector<8x1xf32>
    %cst_1 = arith.constant 3.125000e-02 : f32
    %3 = vector.broadcast %cst_1 : f32 to vector<8x1xf32>
    %4 = arith.mulf %2, %3 : vector<8x1xf32>
    %5 = vector.broadcast %4 : vector<8x1xf32> to vector<8x128xf32>
    %6 = arith.subf %0, %5 : vector<8x128xf32>
    %7 = tpu.iota {dimensions = array<i32: 1>} : vector<8x128xi32>
    %c32_i32 = arith.constant 32 : i32
    %8 = vector.broadcast %c32_i32 : i32 to vector<8x128xi32>
    %9 = arith.cmpi slt, %7, %8 : vector<8x128xi32>
    %cst_2 = arith.constant 0.000000e+00 : f32
    %10 = vector.broadcast %cst_2 : f32 to vector<8x128xf32>
    %11 = arith.select %9, %6, %10 : vector<8x128xi1>, vector<8x128xf32>
    %12 = arith.mulf %11, %11 : vector<8x128xf32>
    %cst_3 = arith.constant dense<0.000000e+00> : vector<8xf32>
    %13 = vector.multi_reduction <add>, %12, %cst_3 [1] : vector<8x128xf32> to vector<8xf32>
    %14 = vector.shape_cast %13 : vector<8xf32> to vector<8x1xf32>
    %cst_4 = arith.constant 3.125000e-02 : f32
    %15 = vector.broadcast %cst_4 : f32 to vector<8x1xf32>
    %16 = arith.mulf %14, %15 : vector<8x1xf32>
    %cst_5 = arith.constant 9.99999974E-6 : f32
    %17 = vector.broadcast %cst_5 : f32 to vector<8x1xf32>
    %18 = arith.addf %16, %17 : vector<8x1xf32>
    %19 = math.rsqrt %18 : vector<8x1xf32>
    %20 = vector.broadcast %19 : vector<8x1xf32> to vector<8x128xf32>
    %21 = arith.mulf %6, %20 : vector<8x128xf32>
    %c0_6 = arith.constant 0 : index
    %c0_7 = arith.constant 0 : index
    %22 = vector.load %arg3[%c0_6, %c0_7] : memref<1x128xf32, #tpu.memory_space<vmem>>, vector<1x128xf32>
    %23 = vector.broadcast %22 : vector<1x128xf32> to vector<8x128xf32>
    %24 = arith.mulf %21, %23 : vector<8x128xf32>
    %c0_8 = arith.constant 0 : index
    %c0_9 = arith.constant 0 : index
    %25 = vector.load %arg4[%c0_8, %c0_9] : memref<1x128xf32, #tpu.memory_space<vmem>>, vector<1x128xf32>
    %26 = vector.broadcast %25 : vector<1x128xf32> to vector<8x128xf32>
    %27 = arith.addf %24, %26 : vector<8x128xf32>
    %c0_10 = arith.constant 0 : index
    %c0_11 = arith.constant 0 : index
    %28 = vector.load %arg5[%c0_10, %c0_11] : memref<128x128xf32, #tpu.memory_space<vmem>>, vector<128x128xf32>
    %cst_12 = arith.constant dense<0.000000e+00> : vector<8x128xf32>
    %29 = tpu.matmul %27, %28, %cst_12 {dimension_numbers = #tpu.dot_dimension_numbers<[1], [0], [0], [1], [0, 0, 1, 1], [], []>} : vector<8x128xf32>, vector<128x128xf32>, vector<8x128xf32> -> vector<8x128xf32>
    %c0_13 = arith.constant 0 : index
    %c0_14 = arith.constant 0 : index
    %30 = vector.load %arg6[%c0_13, %c0_14] : memref<1x128xf32, #tpu.memory_space<vmem>>, vector<1x128xf32>
    %31 = vector.broadcast %30 : vector<1x128xf32> to vector<8x128xf32>
    %32 = arith.addf %29, %31 : vector<8x128xf32>
    %c0_15 = arith.constant 0 : index
    %c0_16 = arith.constant 0 : index
    %33 = vector.load %arg2[%c0_15, %c0_16] : memref<8x128xf32, #tpu.memory_space<vmem>>, vector<8x128xf32>
    %34 = arith.addf %32, %33 : vector<8x128xf32>
    %c0_17 = arith.constant 0 : index
    %c0_18 = arith.constant 0 : index
    %35 = vector.load %arg7[%c0_17, %c0_18] : memref<8x128xf32, #tpu.memory_space<vmem>>, vector<8x128xf32>
    tpu.vector_store %arg7[%c0_17, %c0_18], %34 {strides = array<i32>} : memref<8x128xf32, #tpu.memory_space<vmem>>, vector<8x128xf32>,
    return
  }
  func.func @transform_0(%arg0: i32, %arg1: i32) -> (i32, i32) {
    %c0_i32 = arith.constant 0 : i32
    %c0_i32_0 = arith.constant 0 : i32
    return %arg0, %c0_i32 : i32, i32
  }
  func.func @transform_1(%arg0: i32, %arg1: i32) -> (i32, i32) {
    %c0_i32 = arith.constant 0 : i32
    %c0_i32_0 = arith.constant 0 : i32
    %c0_i32_1 = arith.constant 0 : i32
    return %c0_i32, %c0_i32_0 : i32, i32
  }
  func.func @transform_2(%arg0: i32, %arg1: i32) -> (i32, i32) {
    %c0_i32 = arith.constant 0 : i32
    %c0_i32_0 = arith.constant 0 : i32
    %c0_i32_1 = arith.constant 0 : i32
    return %c0_i32, %c0_i32_0 : i32, i32
  }
  func.func @transform_3(%arg0: i32, %arg1: i32) -> (i32, i32) {
    %c0_i32 = arith.constant 0 : i32
    %c0_i32_0 = arith.constant 0 : i32
    return %c0_i32, %arg1 : i32, i32
  }
  func.func @transform_4(%arg0: i32, %arg1: i32) -> (i32, i32) {
    %c0_i32 = arith.constant 0 : i32
    %c0_i32_0 = arith.constant 0 : i32
    return %c0_i32, %arg1 : i32, i32
  }
  func.func @transform_5(%arg0: i32, %arg1: i32) -> (i32, i32) {
    %c0_i32 = arith.constant 0 : i32
    return %arg0, %arg1 : i32, i32
  }
}

</mosaic_0001>

<llo_original>
// kernel: tpu_custom_call.1
$region0: #{tpu_custom_call.1}
  #allocation0 [shape = 'u32[]', space=smem, size = 0x4, offset = 0x4, fixed_abs, tag = 'smem constant byte address 0x4 - core index']
  #allocation1 [shape = 'u32[144,128]{1,0:T(1,128)}', space=vmem, size = 0x12000, scoped, tag = 'internal scratch']
  %s0 = inlined_call_operand.hbm [shape: f32[16,128], index: 0, kind: input, shape index: {}]
  %s1 = inlined_call_operand.vmem [shape: f32[1,128], index: 1, kind: input, shape index: {}]
  %s2 = inlined_call_operand.vmem [shape: f32[1,128], index: 2, kind: input, shape index: {}]
  %s3 = inlined_call_operand.hbm [shape: f32[128,128], index: 3, kind: input, shape index: {}]
  %s4 = inlined_call_operand.vmem [shape: f32[1,128], index: 4, kind: input, shape index: {}]
  %s5 = inlined_call_operand.hbm [shape: f32[16,128], index: 5, kind: output, shape index: {}]
  %s6 = sld [smem:[#allocation0]]
  $region61: #{tpu_custom_call.1} parent=0
    _
  %s8 = ssub.s32 1, %s6
  %s9 = scalar_select 0, %s8, %s6
  $region1: #{tpu_custom_call.1} parent=0
    #allocation2 [shape = 'u8[8192]{0}', space=vmem, size = 0x2000, scoped, tag = 'input window, operand 0']
    #allocation3 [shape = 's32[2]{0}', space=sflag, size = 0x8, scoped, tag = 'scoped memory for tpu_custom_call.1']
    #allocation4 [shape = 's32[2]{0}', space=sflag, size = 0x8, scoped, tag = 'scoped memory for tpu_custom_call.1']
    #allocation5 [shape = 'u8[65536]{0}', space=vmem, size = 0x10000, scoped, tag = 'input window, operand 3, single buffered']
    #allocation6 [shape = 's32[1]{0}', space=sflag, size = 0x4, scoped, tag = 'scoped memory for tpu_custom_call.1']
    #allocation7 [shape = 'u8[8192]{0}', space=vmem, size = 0x2000, scoped, tag = 'output window, operand 0']
    %10 = vsyncpa [#allocation3], 0
    %s11 = scalar_lea.sflag [#allocation3], 1
    %12 = vsyncpa %s11, 0
    %13 = vsyncpa [#allocation6], 0
    %14 = vsyncpa [#allocation4], 0
    %s15 = scalar_lea.sflag [#allocation4], 1
    %16 = vsyncpa %s15, 0
    loop: start=0, step=1, limit=4
    $region2: #{tpu_custom_call.1} parent=1 // loop_pre_header
      _
    $region3: #{tpu_custom_call.1} parent=1 // loop_header
      %s18 = sphi 0, %s22
      %p19 = scmp.ge.s32.totalorder %s18, 4
      %s25 = sphi 0, %s37
      %s26 = sphi 0, %s33
      %s27 = sphi 0, %s25
      %s28 = sphi 0, %s26
      %s29 = sphi 0, %s27
      %s30 = sphi 0, %s28
      %s40 = sphi 0, %s42
      %s43 = sphi 0, %s40
      %s44 = sphi 0, %s43
      %s60 = sphi 0, %s44
      %s64 = sphi 0, %s64
      %s66 = sphi 0, %s64
      %s67 = sphi 0, %s66
      %s81 = sphi 0, %s67
      %s85 = sphi 0, %s85
      %s87 = sphi 0, %s85
      %s88 = sphi 0, %s87
      %s102 = sphi 0, %s88
      %s108 = sphi 0, %s110
      %s111 = sphi 0, %s108
      %s112 = sphi 0, %s111
      %s128 = sphi 0, %s112
      %s134 = sphi 0, %s136
      %s137 = sphi 0, %s134
      %s138 = sphi 0, %s137
      %s154 = sphi 0, %s138
      %s162 = sphi 0, %s164
      %s165 = sphi 0, %s162
      %s166 = sphi 0, %s165
      %s182 = sphi 0, %s166
    $region4: #{tpu_custom_call.1} parent=1 // loop_header_branch
      %21 = sbr.rel (%p19) target = $region8
    $region5: #{tpu_custom_call.1} parent=1 // loop_body
      %s23 = ssub.s32 %s18, 1
      %s24 = ssub.s32 %s18, 2
      %s31 = sadd.s32 1, %s26
      %p32 = scmp.ge.s32.totalorder %s31, 1
      %s33 = scalar_select %p32, 0, %s31
      %s34 = sadd.s32 1, %s25
      %s35 = scalar_select %p32, %s34, %s25
      %p36 = scmp.ge.s32.totalorder %s35, 2
      %s37 = scalar_select %p36, 0, %s35
      %s38 = ssub.s32 %s25, %s37
      %p39 = scmp.eq.s32.totalorder %s38, 0
      %s41 = sadd.s32 %s40, 1
      %s42 = scalar_select %p39, %s40, %s41
      %p45 = pneg %p39
      %p46 = scmp.eq.s32.totalorder %s18, 1
      %p47 = por %p45, %p46
      %p48 = scmp.ne.s32.totalorder %s40, %s43
      %p49 = scmp.eq.s32.totalorder %s18, 0
      %p50 = por %p48, %p49
      %p51 = scmp.ne.s32.totalorder %s40, %s43
      %p52 = scmp.eq.s32.totalorder %s23, 1
      %p53 = por %p51, %p52
      %p54 = scmp.ne.s32.totalorder %s43, %s44
      %p55 = scmp.eq.s32.totalorder %s23, 0
      %p56 = por %p54, %p55
      %p57 = scmp.ne.s32.totalorder %s43, %s44
      %p58 = scmp.eq.s32.totalorder %s24, 1
      %p59 = por %p57, %p58
      %p61 = scmp.ne.s32.totalorder %s44, %s60
      %p62 = scmp.eq.s32.totalorder %s24, 0
      %p63 = por %p61, %p62
      %s65 = sadd.s32 %s64, 1
      %p68 = scmp.eq.s32.totalorder %s18, 1
      %p69 = scmp.ne.s32.totalorder %s64, %s66
      %p70 = scmp.eq.s32.totalorder %s18, 0
      %p71 = por %p69, %p70
      %p72 = scmp.ne.s32.totalorder %s64, %s66
      %p73 = scmp.eq.s32.totalorder %s23, 1
      %p74 = por %p72, %p73
      %p75 = scmp.ne.s32.totalorder %s66, %s67
      %p76 = scmp.eq.s32.totalorder %s23, 0
      %p77 = por %p75, %p76
      %p78 = scmp.ne.s32.totalorder %s66, %s67
      %p79 = scmp.eq.s32.totalorder %s24, 1
      %p80 = por %p78, %p79
      %p82 = scmp.ne.s32.totalorder %s67, %s81
      %p83 = scmp.eq.s32.totalorder %s24, 0
      %p84 = por %p82, %p83
      %s86 = sadd.s32 %s85, 1
      %p89 = scmp.eq.s32.totalorder %s18, 1
      %p90 = scmp.ne.s32.totalorder %s85, %s87
      %p91 = scmp.eq.s32.totalorder %s18, 0
      %p92 = por %p90, %p91
      %p93 = scmp.ne.s32.totalorder %s85, %s87
      %p94 = scmp.eq.s32.totalorder %s23, 1
      %p95 = por %p93, %p94
      %p96 = scmp.ne.s32.totalorder %s87, %s88
      %p97 = scmp.eq.s32.totalorder %s23, 0
      %p98 = por %p96, %p97
      %p99 = scmp.ne.s32.totalorder %s87, %s88
      %p100 = scmp.eq.s32.totalorder %s24, 1
      %p101 = por %p99, %p100
      %p103 = scmp.ne.s32.totalorder %s88, %s102
      %p104 = scmp.eq.s32.totalorder %s24, 0
      %p105 = por %p103, %p104
      %s106 = ssub.s32 %s26, %s33
      %p107 = scmp.eq.s32.totalorder %s106, 0
      %s109 = sadd.s32 %s108, 1
      %s110 = scalar_select %p107, %s108, %s109
      %p113 = pneg %p107
      %p114 = scmp.eq.s32.totalorder %s18, 1
      %p115 = por %p113, %p114
      %p116 = scmp.ne.s32.totalorder %s108, %s111
      %p117 = scmp.eq.s32.totalorder %s18, 0
      %p118 = por %p116, %p117
      %p119 = scmp.ne.s32.totalorder %s108, %s111
      %p120 = scmp.eq.s32.totalorder %s23, 1
      %p121 = por %p119, %p120
      %p122 = scmp.ne.s32.totalorder %s111, %s112
      %p123 = scmp.eq.s32.totalorder %s23, 0
      %p124 = por %p122, %p123
      %p125 = scmp.ne.s32.totalorder %s111, %s112
      %p126 = scmp.eq.s32.totalorder %s24, 1
      %p127 = por %p125, %p126
      %p129 = scmp.ne.s32.totalorder %s112, %s128
      %p130 = scmp.eq.s32.totalorder %s24, 0
      %p131 = por %p129, %p130
      %s132 = ssub.s32 %s26, %s33
      %p133 = scmp.eq.s32.totalorder %s132, 0
      %s135 = sadd.s32 %s134, 1
      %s136 = scalar_select %p133, %s134, %s135
      %p139 = pneg %p133
      %p140 = scmp.eq.s32.totalorder %s18, 1
      %p141 = por %p139, %p140
      %p142 = scmp.ne.s32.totalorder %s134, %s137
      %p143 = scmp.eq.s32.totalorder %s18, 0
      %p144 = por %p142, %p143
      %p145 = scmp.ne.s32.totalorder %s134, %s137
      %p146 = scmp.eq.s32.totalorder %s23, 1
      %p147 = por %p145, %p146
      %p148 = scmp.ne.s32.totalorder %s137, %s138
      %p149 = scmp.eq.s32.totalorder %s23, 0
      %p150 = por %p148, %p149
      %p151 = scmp.ne.s32.totalorder %s137, %s138
      %p152 = scmp.eq.s32.totalorder %s24, 1
      %p153 = por %p151, %p152
      %p155 = scmp.ne.s32.totalorder %s138, %s154
      %p156 = scmp.eq.s32.totalorder %s24, 0
      %p157 = por %p155, %p156
      %s158 = ssub.s32 %s25, %s37
      %s159 = ssub.s32 %s26, %s33
      %s160 = sor.u32 %s158, %s159
      %p161 = scmp.eq.s32.totalorder %s160, 0
      %s163 = sadd.s32 %s162, 1
      %s164 = scalar_select %p161, %s162, %s163
      %p167 = pneg %p161
      %p168 = scmp.eq.s32.totalorder %s18, 1
      %p169 = por %p167, %p168
      %p170 = scmp.ne.s32.totalorder %s162, %s165
      %p171 = scmp.eq.s32.totalorder %s18, 0
      %p172 = por %p170, %p171
      %p173 = scmp.ne.s32.totalorder %s162, %s165
      %p174 = scmp.eq.s32.totalorder %s23, 1
      %p175 = por %p173, %p174
      %p176 = scmp.ne.s32.totalorder %s165, %s166
      %p177 = scmp.eq.s32.totalorder %s23, 0
      %p178 = por %p176, %p177
      %p179 = scmp.ne.s32.totalorder %s165, %s166
      %p180 = scmp.eq.s32.totalorder %s24, 1
      %p181 = por %p179, %p180
      %p183 = scmp.ne.s32.totalorder %s166, %s182
      %p184 = scmp.eq.s32.totalorder %s24, 0
      %p185 = por %p183, %p184
      %p186 = scmp.le.s32.totalorder 1, %s18
      %p187 = scmp.lt.s32.totalorder %s18, 3
      %p188 = pnand %p186, %p187
      %p189 = pneg %p188
      // Predicated region
      $region9: #{tpu_custom_call.1} parent=5 // pred_check
        _
      $region10: #{tpu_custom_call.1} parent=5 // pred_check_branch
        %191 = sbr.rel (%p188) target = $region12
      $region11: #{tpu_custom_call.1} parent=5 // pred_region
        %s192 = ssub.s32 %s18, 1
        // Predicated region
        $region13: #{tpu_custom_call.1} parent=11 // pred_check
          %p193 = pneg %p77
        $region14: #{tpu_custom_call.1} parent=11 // pred_check_branch
          %195 = sbr.rel (%p193) target = $region16
        $region15: #{tpu_custom_call.1} parent=11 // pred_region
          _
        $region16: #{tpu_custom_call.1} parent=11 // pred_fallthru
          _
        // Predicated region
        $region17: #{tpu_custom_call.1} parent=11 // pred_check
          %p196 = pneg %p98
        $region18: #{tpu_custom_call.1} parent=11 // pred_check_branch
          %198 = sbr.rel (%p196) target = $region20
        $region19: #{tpu_custom_call.1} parent=11 // pred_region
          _
        $region20: #{tpu_custom_call.1} parent=11 // pred_fallthru
          _
        // Predicated region
        $region21: #{tpu_custom_call.1} parent=11 // pred_check
          %p199 = pneg %p124
        $region22: #{tpu_custom_call.1} parent=11 // pred_check_branch
          %201 = sbr.rel (%p199) target = $region24
        $region23: #{tpu_custom_call.1} parent=11 // pred_region
          %s203 = ssub.s32 2048, 2048
          %204 = vsyncadd [#allocation6], %s203
          %s205 = smul.addr %s28, 128
          %s206 = scalar_lea.hbm %s3, %s205
          %s207 = sshll.u32 [#allocation5], 4
          %s208 = int_to_ptr.vmem [resolvable:$true] %s207
          %213 = dma.hbm_to_vmem [thread:$0]  %s206, 2048, %s208, [#allocation6], 128, 128, 8
        $region24: #{tpu_custom_call.1} parent=11 // pred_fallthru
          _
        // Predicated region
        $region25: #{tpu_custom_call.1} parent=11 // pred_check
          %p214 = pneg %p150
        $region26: #{tpu_custom_call.1} parent=11 // pred_check_branch
          %216 = sbr.rel (%p214) target = $region28
        $region27: #{tpu_custom_call.1} parent=11 // pred_region
          %p217 = scmp.lt.s32.totalorder %s28, 0
          %s218 = scalar_select %p217, %s28, 0
          %s219 = scalar_lea.vmem %s4, %s218
        $region28: #{tpu_custom_call.1} parent=11 // pred_fallthru
          _
      $region12: #{tpu_custom_call.1} parent=5 // pred_fallthru
        _
      %p220 = scmp.lt.s32.totalorder %s18, 2
      // Predicated region
      $region29: #{tpu_custom_call.1} parent=5 // pred_check
        %p221 = pneg %p220
      $region30: #{tpu_custom_call.1} parent=5 // pred_check_branch
        %223 = sbr.rel (%p221) target = $region32
      $region31: #{tpu_custom_call.1} parent=5 // pred_region
        // Predicated region
        $region33: #{tpu_custom_call.1} parent=31 // pred_check
          %p224 = pneg %p50
        $region34: #{tpu_custom_call.1} parent=31 // pred_check_branch
          %226 = sbr.rel (%p224) target = $region36
        $region35: #{tpu_custom_call.1} parent=31 // pred_region
          %s227 = sand.u32 %s40, 1
          %s228 = scalar_lea.sflag [#allocation3], %s227
          %s229 = sand.u32 %s40, 1
          %s230 = smul.addr %s229, 8
          %s231 = scalar_lea.vmem [#allocation2], %s230
          %s233 = ssub.s32 128, 128
          %234 = vsyncadd %s228, %s233
          %s235 = smul.addr %s25, 128
          %s236 = scalar_lea.hbm %s0, %s235
          %s238 = sshll.u32 %s231, 4
          %s239 = int_to_ptr.vmem [resolvable:$true] %s238
          %241 = dma.hbm_to_vmem [thread:$0]  %s236, 128, %s239, %s228
        $region36: #{tpu_custom_call.1} parent=31 // pred_fallthru
          _
      $region32: #{tpu_custom_call.1} parent=5 // pred_fallthru
        _
      %p242 = scmp.le.s32.totalorder 1, %s18
      %p243 = scmp.lt.s32.totalorder %s18, 3
      %p244 = pnand %p242, %p243
      %p245 = pneg %p244
      // Predicated region
      $region37: #{tpu_custom_call.1} parent=5 // pred_check
        _
      $region38: #{tpu_custom_call.1} parent=5 // pred_check_branch
        %247 = sbr.rel (%p244) target = $region40
      $region39: #{tpu_custom_call.1} parent=5 // pred_region
        %s248 = ssub.s32 %s18, 1
        %s249 = sand.u32 %s43, 1
        %s250 = scalar_lea.sflag [#allocation3], %s249
        %s251 = sand.u32 %s43, 1
        %s252 = smul.addr %s251, 8
        %s253 = scalar_lea.vmem [#allocation2], %s252
        // Predicated region
        $region41: #{tpu_custom_call.1} parent=39 // pred_check
          %p254 = pneg %p56
        $region42: #{tpu_custom_call.1} parent=39 // pred_check_branch
          %256 = sbr.rel (%p254) target = $region44
        $region43: #{tpu_custom_call.1} parent=39 // pred_region
          %257 = dma.done %s250, 128
        $region44: #{tpu_custom_call.1} parent=39 // pred_fallthru
          _
        // Predicated region
        $region45: #{tpu_custom_call.1} parent=39 // pred_check
          %p258 = pneg %p124
        $region46: #{tpu_custom_call.1} parent=39 // pred_check_branch
          %260 = sbr.rel (%p258) target = $region48
        $region47: #{tpu_custom_call.1} parent=39 // pred_region
          %261 = dma.done [#allocation6], 2048
        $region48: #{tpu_custom_call.1} parent=39 // pred_fallthru
          _
        %s262 = sand.u32 %s43, 1
        %s263 = scalar_lea.sflag [#allocation3], %s262
        %s264 = sand.u32 %s43, 1
        %s265 = smul.addr %s264, 8
        %s266 = scalar_lea.vmem [#allocation2], %s265
        %p267 = pneg %p56
        %p268 = pneg %p53
        %p269 = pneg %p77
        %p270 = pneg %p74
        %p271 = pneg %p98
        %p272 = pneg %p95
        %p273 = pneg %p124
        %p274 = pneg %p121
        %p275 = scmp.lt.s32.totalorder %s28, 0
        %s276 = scalar_select %p275, %s28, 0
        %s277 = scalar_lea.vmem %s4, %s276
        %p278 = pneg %p150
        %p279 = pneg %p147
        %p280 = pneg %p178
        %p281 = pneg %p175
        %s282 = sand.u32 %s165, 1
        %s283 = scalar_lea.sflag [#allocation4], %s282
        %s284 = sand.u32 %s165, 1
        %s285 = smul.addr %s284, 8
        %s286 = scalar_lea.vmem [#allocation7], %s285
        %p287 = scmp.lt.s32.totalorder %s28, 0
        %s288 = scalar_select %p287, %s28, 0
        %s289 = scalar_lea.vmem %s4, %s288
        %v290 = vld [vmem:[%s253] sm:$0xff]
        %291 = vadd.xlane.f32.xlu0 %v290
        %v292 = vpop.xlane.xlu0 %291
        %v293 = vmul.f32 %v292, 0.03125
        %v294 = vsub.f32 %v290, %v293
        %v295 = vlaneseq
        %v296 = vand.u32 %v295, 127
        %vm297 = vcmp.lt.s32.totalorder %v296, 32
        %v298 = vsel %vm297, %v294, 0.0
        %v299 = vmul.f32 %v298, %v298
        %300 = vadd.xlane.f32.xlu0 %v299
        %v301 = vpop.xlane.xlu0 %300
        %v302 = vmul.f32 %v301, 0.03125
        %v303 = vadd.f32 %v302, 1e-05
        %v304 = vrsqrt.pop %v303
        %v305 = vmul.f32 %v294, %v304
        %v306 = vld [vmem:[%s1] sm:$0x1]
        %v308 = vlaneseq
        %v309 = vshrl.u32 %v308, 7
        %v310 = vsub.s32 0, %v309
        %v311 = vrot.slane %v306, %v310
        %v313 = vmul.f32 %v305, %v311
        %v314 = vld [vmem:[%s2] sm:$0x1]
        %v316 = vlaneseq
        %v317 = vshrl.u32 %v316, 7
        %v318 = vsub.s32 0, %v317
        %v319 = vrot.slane %v314, %v318
        %v321 = vadd.f32 %v313, %v319
        %v322 = vld [vmem:[#allocation5] sm:$0xff]
        %v323 = vld [vmem:[#allocation5 + $0x8] sm:$0xff]
        %v324 = vld [vmem:[#allocation5 + $0x10] sm:$0xff]
        %v325 = vld [vmem:[#allocation5 + $0x18] sm:$0xff]
        %v326 = vld [vmem:[#allocation5 + $0x20] sm:$0xff]
        %v327 = vld [vmem:[#allocation5 + $0x28] sm:$0xff]
        %v328 = vld [vmem:[#allocation5 + $0x30] sm:$0xff]
        %v329 = vld [vmem:[#allocation5 + $0x38] sm:$0xff]
        %v330 = vld [vmem:[#allocation5 + $0x40] sm:$0xff]
        %v331 = vld [vmem:[#allocation5 + $0x48] sm:$0xff]
        %v332 = vld [vmem:[#allocation5 + $0x50] sm:$0xff]
        %v333 = vld [vmem:[#allocation5 + $0x58] sm:$0xff]
        %v334 = vld [vmem:[#allocation5 + $0x60] sm:$0xff]
        %v335 = vld [vmem:[#allocation5 + $0x68] sm:$0xff]
        %v336 = vld [vmem:[#allocation5 + $0x70] sm:$0xff]
        %v337 = vld [vmem:[#allocation5 + $0x78] sm:$0xff]
        %v338 = vld [vmem:[%s289] sm:$0x1]
        %v340 = vlaneseq
        %v341 = vshrl.u32 %v340, 7
        %v342 = vsub.s32 0, %v341
        %v343 = vrot.slane %v338, %v342
        %345 = vmatprep.subr.mxu0 0.0
        %346 = vmatpush1.msra.mxu0 %v322
        %347 = vmatprep.subr.mxu0 0.0
        %348 = vmatpush1.msra.mxu0 %v323
        %349 = vmatprep.subr.mxu0 0.0
        %350 = vmatpush1.msra.mxu0 %v324
        %351 = vmatprep.subr.mxu0 0.0
        %352 = vmatpush1.msra.mxu0 %v325
        %353 = vmatprep.subr.mxu0 0.0
        %354 = vmatpush1.msra.mxu0 %v326
        %355 = vmatprep.subr.mxu0 0.0
        %356 = vmatpush1.msra.mxu0 %v327
        %357 = vmatprep.subr.mxu0 0.0
        %358 = vmatpush1.msra.mxu0 %v328
        %359 = vmatprep.subr.mxu0 0.0
        %360 = vmatpush1.msra.mxu0 %v329
        %361 = vmatprep.subr.mxu0 0.0
        %362 = vmatpush1.msra.mxu0 %v330
        %363 = vmatprep.subr.mxu0 0.0
        %364 = vmatpush1.msra.mxu0 %v331
        %365 = vmatprep.subr.mxu0 0.0
        %366 = vmatpush1.msra.mxu0 %v332
        %367 = vmatprep.subr.mxu0 0.0
        %368 = vmatpush1.msra.mxu0 %v333
        %369 = vmatprep.subr.mxu0 0.0
        %370 = vmatpush1.msra.mxu0 %v334
        %371 = vmatprep.subr.mxu0 0.0
        %372 = vmatpush1.msra.mxu0 %v335
        %373 = vmatprep.subr.mxu0 0.0
        %374 = vmatpush1.msra.mxu0 %v336
        %375 = vmatprep.subr.mxu0 0.0
        %376 = vmatpush1.msra.mxu0 %v337
        %377 = vmatprep.subr.mxu0 0.0
        %378 = vmatpush1.msra.mxu0 0.0
        %379 = vmatprep.subr.mxu0 0.0
        %380 = vmatpush1.msra.mxu0 0.0
        %381 = vmatprep.subr.mxu0 0.0
        %382 = vmatpush1.msra.mxu0 0.0
        %383 = vmatprep.subr.mxu0 0.0
        %384 = vmatpush1.msra.mxu0 0.0
        %385 = vmatprep.subr.mxu0 0.0
        %386 = vmatpush1.msra.mxu0 0.0
        %387 = vmatprep.subr.mxu0 0.0
        %388 = vmatpush1.msra.mxu0 0.0
        %389 = vmatprep.subr.mxu0 0.0
        %390 = vmatpush1.msra.mxu0 0.0
        %391 = vmatprep.subr.mxu0 0.0
        %392 = vmatpush1.msra.mxu0 0.0
        %393 = vmatprep.subr.mxu0 0.0
        %394 = vmatpush1.msra.mxu0 0.0
        %395 = vmatprep.subr.mxu0 0.0
        %396 = vmatpush1.msra.mxu0 0.0
        %397 = vmatprep.subr.mxu0 0.0
        %398 = vmatpush1.msra.mxu0 0.0
        %399 = vmatprep.subr.mxu0 0.0
        %400 = vmatpush1.msra.mxu0 0.0
        %401 = vmatprep.subr.mxu0 0.0
        %402 = vmatpush1.msra.mxu0 0.0
        %403 = vmatprep.subr.mxu0 0.0
        %404 = vmatpush1.msra.mxu0 0.0
        %405 = vmatprep.subr.mxu0 0.0
        %406 = vmatpush1.msra.mxu0 0.0
        %407 = vmatprep.subr.mxu0 0.0
        %408 = vmatpush1.msra.mxu0 0.0
        %409 = vmatprep.mubr.f32.mxu0 0.0
        %410 = vmatmul.mubr.f32.gmra.mrb[0].mxu0 %v321
        %v411 = vpop.f32.mrb[0].mxu0
        %v412 = vadd.f32 %v343, %v411
        %v413 = vpop.f32.mrb[0].mxu0
        %414 = vdwg.mxu0
        %v415 = vadd.f32 %v412, %v290
        %416 = vst [vmem:[%s286] sm:$0xff] %v415
        %s417 = sand.u32 %s165, 1
        %s418 = scalar_lea.sflag [#allocation4], %s417
        %s419 = sand.u32 %s165, 1
        %s420 = smul.addr %s419, 8
        %s421 = scalar_lea.vmem [#allocation7], %s420
        // Predicated region
        $region49: #{tpu_custom_call.1} parent=39 // pred_check
          %p422 = pneg %p175
        $region50: #{tpu_custom_call.1} parent=39 // pred_check_branch
          %424 = sbr.rel (%p422) target = $region52
        $region51: #{tpu_custom_call.1} parent=39 // pred_region
          %s426 = ssub.s32 128, 128
          %427 = vsyncadd %s418, %s426
          %s428 = sadd.s32 %s28, %s27
          %s429 = smul.addr %s428, 128
          %s430 = scalar_lea.hbm %s5, %s429
          %s432 = sshll.u32 %s421, 4
          %s433 = int_to_ptr.vmem [resolvable:$true] %s432
          %435 = dma.vmem_to_hbm [thread:$0]  %s433, 128, %s430, %s418
        $region52: #{tpu_custom_call.1} parent=39 // pred_fallthru
          _
      $region40: #{tpu_custom_call.1} parent=5 // pred_fallthru
        _
      %p436 = scmp.le.s32.totalorder 2, %s18
      // Predicated region
      $region53: #{tpu_custom_call.1} parent=5 // pred_check
        %p437 = pneg %p436
      $region54: #{tpu_custom_call.1} parent=5 // pred_check_branch
        %439 = sbr.rel (%p437) target = $region56
      $region55: #{tpu_custom_call.1} parent=5 // pred_region
        %s440 = ssub.s32 %s18, 2
        // Predicated region
        $region57: #{tpu_custom_call.1} parent=55 // pred_check
          %p441 = pneg %p181
        $region58: #{tpu_custom_call.1} parent=55 // pred_check_branch
          %443 = sbr.rel (%p441) target = $region60
        $region59: #{tpu_custom_call.1} parent=55 // pred_region
          %s444 = sand.u32 %s166, 1
          %s445 = scalar_lea.sflag [#allocation4], %s444
          %s446 = sand.u32 %s166, 1
          %s447 = smul.addr %s446, 8
          %s448 = scalar_lea.vmem [#allocation7], %s447
          %449 = dma.done %s445, 128
        $region60: #{tpu_custom_call.1} parent=55 // pred_fallthru
          _
      $region56: #{tpu_custom_call.1} parent=5 // pred_fallthru
        _
    $region6: #{tpu_custom_call.1} parent=1 // loop_footer
      %s22 = sadd.s32 1, %s18
    $region7: #{tpu_custom_call.1} parent=1 // loop_footer_branch
      %17 = sbr.rel target = $region3
    $region8: #{tpu_custom_call.1} parent=1 // loop_exit
      _
    %450 = vsyncpa [#allocation3], 1
    %s451 = scalar_lea.sflag [#allocation3], 1
    %452 = vsyncpa %s451, 1
    %453 = vsyncpa [#allocation6], 1
    %454 = vsyncpa [#allocation4], 1
    %s455 = scalar_lea.sflag [#allocation4], 1
    %456 = vsyncpa %s455, 1

// kernel: tpu_custom_call.1
$region0: #{tpu_custom_call.1}
  #allocation0 [shape = 'u32[]', space=smem, size = 0x4, offset = 0x4, fixed_abs, tag = 'smem constant byte address 0x4 - core index']
  #allocation1 [shape = 'u32[144,128]{1,0:T(1,128)}', space=vmem, size = 0x12000, scoped, tag = 'internal scratch']
  %s0 = inlined_call_operand.hbm [shape: f32[16,128], index: 0, kind: input, shape index: {}]
  %s1 = inlined_call_operand.vmem [shape: f32[1,128], index: 1, kind: input, shape index: {}]
  %s2 = inlined_call_operand.vmem [shape: f32[1,128], index: 2, kind: input, shape index: {}]
  %s3 = inlined_call_operand.hbm [shape: f32[128,128], index: 3, kind: input, shape index: {}]
  %s4 = inlined_call_operand.vmem [shape: f32[1,128], index: 4, kind: input, shape index: {}]
  %s5 = inlined_call_operand.hbm [shape: f32[16,128], index: 5, kind: output, shape index: {}]
  %s6 = sld [smem:[#allocation0]]
  $region61: #{tpu_custom_call.1} parent=0
    _
  %s8 = ssub.s32 1, %s6
  %s9 = scalar_select 0, %s8, %s6
  $region1: #{tpu_custom_call.1} parent=0
    #allocation2 [shape = 'u8[8192]{0}', space=vmem, size = 0x2000, scoped, tag = 'input window, operand 0']
    #allocation3 [shape = 's32[2]{0}', space=sflag, size = 0x8, scoped, tag = 'scoped memory for tpu_custom_call.1']
    #allocation4 [shape = 's32[2]{0}', space=sflag, size = 0x8, scoped, tag = 'scoped memory for tpu_custom_call.1']
    #allocation5 [shape = 'u8[65536]{0}', space=vmem, size = 0x10000, scoped, tag = 'input window, operand 3, single buffered']
    #allocation6 [shape = 's32[1]{0}', space=sflag, size = 0x4, scoped, tag = 'scoped memory for tpu_custom_call.1']
    #allocation7 [shape = 'u8[8192]{0}', space=vmem, size = 0x2000, scoped, tag = 'output window, operand 0']
    %10 = vsyncpa [#allocation3], 0
    %s11 = scalar_lea.sflag [#allocation3], 1
    %12 = vsyncpa %s11, 0
    %13 = vsyncpa [#allocation6], 0
    %14 = vsyncpa [#allocation4], 0
    %s15 = scalar_lea.sflag [#allocation4], 1
    %16 = vsyncpa %s15, 0
    loop: start=0, step=1, limit=4
    $region2: #{tpu_custom_call.1} parent=1 // loop_pre_header
      _
    $region3: #{tpu_custom_call.1} parent=1 // loop_header
      %s18 = sphi 0, %s22
      %p19 = scmp.ge.s32.totalorder %s18, 4
      %s25 = sphi 0, %s37
      %s26 = sphi 0, %s33
      %s27 = sphi 0, %s25
      %s28 = sphi 0, %s26
      %s29 = sphi 0, %s27
      %s30 = sphi 0, %s28
      %s40 = sphi 0, %s42
      %s43 = sphi 0, %s40
      %s44 = sphi 0, %s43
      %s60 = sphi 0, %s44
      %s64 = sphi 0, %s64
      %s66 = sphi 0, %s64
      %s67 = sphi 0, %s66
      %s81 = sphi 0, %s67
      %s85 = sphi 0, %s85
      %s87 = sphi 0, %s85
      %s88 = sphi 0, %s87
      %s102 = sphi 0, %s88
      %s108 = sphi 0, %s110
      %s111 = sphi 0, %s108
      %s112 = sphi 0, %s111
      %s128 = sphi 0, %s112
      %s134 = sphi 0, %s136
      %s137 = sphi 0, %s134
      %s138 = sphi 0, %s137
      %s154 = sphi 0, %s138
      %s162 = sphi 0, %s164
      %s165 = sphi 0, %s162
      %s166 = sphi 0, %s165
      %s182 = sphi 0, %s166
    $region4: #{tpu_custom_call.1} parent=1 // loop_header_branch
      %21 = sbr.rel (%p19) target = $region8
    $region5: #{tpu_custom_call.1} parent=1 // loop_body
      %s23 = ssub.s32 %s18, 1
      %s24 = ssub.s32 %s18, 2
      %s31 = sadd.s32 1, %s26
      %p32 = scmp.ge.s32.totalorder %s31, 1
      %s33 = scalar_select %p32, 0, %s31
      %s34 = sadd.s32 1, %s25
      %s35 = scalar_select %p32, %s34, %s25
      %p36 = scmp.ge.s32.totalorder %s35, 2
      %s37 = scalar_select %p36, 0, %s35
      %s38 = ssub.s32 %s25, %s37
      %p39 = scmp.eq.s32.totalorder %s38, 0
      %s41 = sadd.s32 %s40, 1
      %s42 = scalar_select %p39, %s40, %s41
      %p45 = pneg %p39
      %p46 = scmp.eq.s32.totalorder %s18, 1
      %p47 = por %p45, %p46
      %p48 = scmp.ne.s32.totalorder %s40, %s43
      %p49 = scmp.eq.s32.totalorder %s18, 0
      %p50 = por %p48, %p49
      %p51 = scmp.ne.s32.totalorder %s40, %s43
      %p52 = scmp.eq.s32.totalorder %s23, 1
      %p53 = por %p51, %p52
      %p54 = scmp.ne.s32.totalorder %s43, %s44
      %p55 = scmp.eq.s32.totalorder %s23, 0
      %p56 = por %p54, %p55
      %p57 = scmp.ne.s32.totalorder %s43, %s44
      %p58 = scmp.eq.s32.totalorder %s24, 1
      %p59 = por %p57, %p58
      %p61 = scmp.ne.s32.totalorder %s44, %s60
      %p62 = scmp.eq.s32.totalorder %s24, 0
      %p63 = por %p61, %p62
      %s65 = sadd.s32 %s64, 1
      %p68 = scmp.eq.s32.totalorder %s18, 1
      %p69 = scmp.ne.s32.totalorder %s64, %s66
      %p70 = scmp.eq.s32.totalorder %s18, 0
      %p71 = por %p69, %p70
      %p72 = scmp.ne.s32.totalorder %s64, %s66
      %p73 = scmp.eq.s32.totalorder %s23, 1
      %p74 = por %p72, %p73
      %p75 = scmp.ne.s32.totalorder %s66, %s67
      %p76 = scmp.eq.s32.totalorder %s23, 0
      %p77 = por %p75, %p76
      %p78 = scmp.ne.s32.totalorder %s66, %s67
      %p79 = scmp.eq.s32.totalorder %s24, 1
      %p80 = por %p78, %p79
      %p82 = scmp.ne.s32.totalorder %s67, %s81
      %p83 = scmp.eq.s32.totalorder %s24, 0
      %p84 = por %p82, %p83
      %s86 = sadd.s32 %s85, 1
      %p89 = scmp.eq.s32.totalorder %s18, 1
      %p90 = scmp.ne.s32.totalorder %s85, %s87
      %p91 = scmp.eq.s32.totalorder %s18, 0
      %p92 = por %p90, %p91
      %p93 = scmp.ne.s32.totalorder %s85, %s87
      %p94 = scmp.eq.s32.totalorder %s23, 1
      %p95 = por %p93, %p94
      %p96 = scmp.ne.s32.totalorder %s87, %s88
      %p97 = scmp.eq.s32.totalorder %s23, 0
      %p98 = por %p96, %p97
      %p99 = scmp.ne.s32.totalorder %s87, %s88
      %p100 = scmp.eq.s32.totalorder %s24, 1
      %p101 = por %p99, %p100
      %p103 = scmp.ne.s32.totalorder %s88, %s102
      %p104 = scmp.eq.s32.totalorder %s24, 0
      %p105 = por %p103, %p104
      %s106 = ssub.s32 %s26, %s33
      %p107 = scmp.eq.s32.totalorder %s106, 0
      %s109 = sadd.s32 %s108, 1
      %s110 = scalar_select %p107, %s108, %s109
      %p113 = pneg %p107
      %p114 = scmp.eq.s32.totalorder %s18, 1
      %p115 = por %p113, %p114
      %p116 = scmp.ne.s32.totalorder %s108, %s111
      %p117 = scmp.eq.s32.totalorder %s18, 0
      %p118 = por %p116, %p117
      %p119 = scmp.ne.s32.totalorder %s108, %s111
      %p120 = scmp.eq.s32.totalorder %s23, 1
      %p121 = por %p119, %p120
      %p122 = scmp.ne.s32.totalorder %s111, %s112
      %p123 = scmp.eq.s32.totalorder %s23, 0
      %p124 = por %p122, %p123
      %p125 = scmp.ne.s32.totalorder %s111, %s112
      %p126 = scmp.eq.s32.totalorder %s24, 1
      %p127 = por %p125, %p126
      %p129 = scmp.ne.s32.totalorder %s112, %s128
      %p130 = scmp.eq.s32.totalorder %s24, 0
      %p131 = por %p129, %p130
      %s132 = ssub.s32 %s26, %s33
      %p133 = scmp.eq.s32.totalorder %s132, 0
      %s135 = sadd.s32 %s134, 1
      %s136 = scalar_select %p133, %s134, %s135
      %p139 = pneg %p133
      %p140 = scmp.eq.s32.totalorder %s18, 1
      %p141 = por %p139, %p140
      %p142 = scmp.ne.s32.totalorder %s134, %s137
      %p143 = scmp.eq.s32.totalorder %s18, 0
      %p144 = por %p142, %p143
      %p145 = scmp.ne.s32.totalorder %s134, %s137
      %p146 = scmp.eq.s32.totalorder %s23, 1
      %p147 = por %p145, %p146
      %p148 = scmp.ne.s32.totalorder %s137, %s138
      %p149 = scmp.eq.s32.totalorder %s23, 0
      %p150 = por %p148, %p149
      %p151 = scmp.ne.s32.totalorder %s137, %s138
      %p152 = scmp.eq.s32.totalorder %s24, 1
      %p153 = por %p151, %p152
      %p155 = scmp.ne.s32.totalorder %s138, %s154
      %p156 = scmp.eq.s32.totalorder %s24, 0
      %p157 = por %p155, %p156
      %s158 = ssub.s32 %s25, %s37
      %s159 = ssub.s32 %s26, %s33
      %s160 = sor.u32 %s158, %s159
      %p161 = scmp.eq.s32.totalorder %s160, 0
      %s163 = sadd.s32 %s162, 1
      %s164 = scalar_select %p161, %s162, %s163
      %p167 = pneg %p161
      %p168 = scmp.eq.s32.totalorder %s18, 1
      %p169 = por %p167, %p168
      %p170 = scmp.ne.s32.totalorder %s162, %s165
      %p171 = scmp.eq.s32.totalorder %s18, 0
      %p172 = por %p170, %p171
      %p173 = scmp.ne.s32.totalorder %s162, %s165
      %p174 = scmp.eq.s32.totalorder %s23, 1
      %p175 = por %p173, %p174
      %p176 = scmp.ne.s32.totalorder %s165, %s166
      %p177 = scmp.eq.s32.totalorder %s23, 0
      %p178 = por %p176, %p177
      %p179 = scmp.ne.s32.totalorder %s165, %s166
      %p180 = scmp.eq.s32.totalorder %s24, 1
      %p181 = por %p179, %p180
      %p183 = scmp.ne.s32.totalorder %s166, %s182
      %p184 = scmp.eq.s32.totalorder %s24, 0
      %p185 = por %p183, %p184
      %p186 = scmp.le.s32.totalorder 1, %s18
      %p187 = scmp.lt.s32.totalorder %s18, 3
      %p188 = pnand %p186, %p187
      %p189 = pneg %p188
      // Predicated region
      $region9: #{tpu_custom_call.1} parent=5 // pred_check
        _
      $region10: #{tpu_custom_call.1} parent=5 // pred_check_branch
        %191 = sbr.rel (%p188) target = $region12
      $region11: #{tpu_custom_call.1} parent=5 // pred_region
        %s192 = ssub.s32 %s18, 1
        // Predicated region
        $region13: #{tpu_custom_call.1} parent=11 // pred_check
          %p193 = pneg %p77
        $region14: #{tpu_custom_call.1} parent=11 // pred_check_branch
          %195 = sbr.rel (%p193) target = $region16
        $region15: #{tpu_custom_call.1} parent=11 // pred_region
          _
        $region16: #{tpu_custom_call.1} parent=11 // pred_fallthru
          _
        // Predicated region
        $region17: #{tpu_custom_call.1} parent=11 // pred_check
          %p196 = pneg %p98
        $region18: #{tpu_custom_call.1} parent=11 // pred_check_branch
          %198 = sbr.rel (%p196) target = $region20
        $region19: #{tpu_custom_call.1} parent=11 // pred_region
          _
        $region20: #{tpu_custom_call.1} parent=11 // pred_fallthru
          _
        // Predicated region
        $region21: #{tpu_custom_call.1} parent=11 // pred_check
          %p199 = pneg %p124
        $region22: #{tpu_custom_call.1} parent=11 // pred_check_branch
          %201 = sbr.rel (%p199) target = $region24
        $region23: #{tpu_custom_call.1} parent=11 // pred_region
          %s203 = ssub.s32 2048, 2048
          %204 = vsyncadd [#allocation6], %s203
          %s205 = smul.addr %s28, 128
          %s206 = scalar_lea.hbm %s3, %s205
          %s207 = sshll.u32 [#allocation5], 4
          %s208 = int_to_ptr.vmem [resolvable:$true] %s207
          %213 = dma.hbm_to_vmem [thread:$0]  %s206, 2048, %s208, [#allocation6], 128, 128, 8
        $region24: #{tpu_custom_call.1} parent=11 // pred_fallthru
          _
        // Predicated region
        $region25: #{tpu_custom_call.1} parent=11 // pred_check
          %p214 = pneg %p150
        $region26: #{tpu_custom_call.1} parent=11 // pred_check_branch
          %216 = sbr.rel (%p214) target = $region28
        $region27: #{tpu_custom_call.1} parent=11 // pred_region
          %p217 = scmp.lt.s32.totalorder %s28, 0
          %s218 = scalar_select %p217, %s28, 0
          %s219 = scalar_lea.vmem %s4, %s218
        $region28: #{tpu_custom_call.1} parent=11 // pred_fallthru
          _
      $region12: #{tpu_custom_call.1} parent=5 // pred_fallthru
        _
      %p220 = scmp.lt.s32.totalorder %s18, 2
      // Predicated region
      $region29: #{tpu_custom_call.1} parent=5 // pred_check
        %p221 = pneg %p220
      $region30: #{tpu_custom_call.1} parent=5 // pred_check_branch
        %223 = sbr.rel (%p221) target = $region32
      $region31: #{tpu_custom_call.1} parent=5 // pred_region
        // Predicated region
        $region33: #{tpu_custom_call.1} parent=31 // pred_check
          %p224 = pneg %p50
        $region34: #{tpu_custom_call.1} parent=31 // pred_check_branch
          %226 = sbr.rel (%p224) target = $region36
        $region35: #{tpu_custom_call.1} parent=31 // pred_region
          %s227 = sand.u32 %s40, 1
          %s228 = scalar_lea.sflag [#allocation3], %s227
          %s229 = sand.u32 %s40, 1
          %s230 = smul.addr %s229, 8
          %s231 = scalar_lea.vmem [#allocation2], %s230
          %s233 = ssub.s32 128, 128
          %234 = vsyncadd %s228, %s233
          %s235 = smul.addr %s25, 128
          %s236 = scalar_lea.hbm %s0, %s235
          %s238 = sshll.u32 %s231, 4
          %s239 = int_to_ptr.vmem [resolvable:$true] %s238
          %241 = dma.hbm_to_vmem [thread:$0]  %s236, 128, %s239, %s228
        $region36: #{tpu_custom_call.1} parent=31 // pred_fallthru
          _
      $region32: #{tpu_custom_call.1} parent=5 // pred_fallthru
        _
      %p242 = scmp.le.s32.totalorder 1, %s18
      %p243 = scmp.lt.s32.totalorder %s18, 3
      %p244 = pnand %p242, %p243
      %p245 = pneg %p244
      // Predicated region
      $region37: #{tpu_custom_call.1} parent=5 // pred_check
        _
      $region38: #{tpu_custom_call.1} parent=5 // pred_check_branch
        %247 = sbr.rel (%p244) target = $region40
      $region39: #{tpu_custom_call.1} parent=5 // pred_region
        %s248 = ssub.s32 %s18, 1
        %s249 = sand.u32 %s43, 1
        %s250 = scalar_lea.sflag [#allocation3], %s249
        %s251 = sand.u32 %s43, 1
        %s252 = smul.addr %s251, 8
        %s253 = scalar_lea.vmem [#allocation2], %s252
        // Predicated region
        $region41: #{tpu_custom_call.1} parent=39 // pred_check
          %p254 = pneg %p56
        $region42: #{tpu_custom_call.1} parent=39 // pred_check_branch
          %256 = sbr.rel (%p254) target = $region44
        $region43: #{tpu_custom_call.1} parent=39 // pred_region
          %257 = dma.done %s250, 128
        $region44: #{tpu_custom_call.1} parent=39 // pred_fallthru
          _
        // Predicated region
        $region45: #{tpu_custom_call.1} parent=39 // pred_check
          %p258 = pneg %p124
        $region46: #{tpu_custom_call.1} parent=39 // pred_check_branch
          %260 = sbr.rel (%p258) target = $region48
        $region47: #{tpu_custom_call.1} parent=39 // pred_region
          %261 = dma.done [#allocation6], 2048
        $region48: #{tpu_custom_call.1} parent=39 // pred_fallthru
          _
        %s262 = sand.u32 %s43, 1
        %s263 = scalar_lea.sflag [#allocation3], %s262
        %s264 = sand.u32 %s43, 1
        %s265 = smul.addr %s264, 8
        %s266 = scalar_lea.vmem [#allocation2], %s265
        %p267 = pneg %p56
        %p268 = pneg %p53
        %p269 = pneg %p77
        %p270 = pneg %p74
        %p271 = pneg %p98
        %p272 = pneg %p95
        %p273 = pneg %p124
        %p274 = pneg %p121
        %p275 = scmp.lt.s32.totalorder %s28, 0
        %s276 = scalar_select %p275, %s28, 0
        %s277 = scalar_lea.vmem %s4, %s276
        %p278 = pneg %p150
        %p279 = pneg %p147
        %p280 = pneg %p178
        %p281 = pneg %p175
        %s282 = sand.u32 %s165, 1
        %s283 = scalar_lea.sflag [#allocation4], %s282
        %s284 = sand.u32 %s165, 1
        %s285 = smul.addr %s284, 8
        %s286 = scalar_lea.vmem [#allocation7], %s285
        %p287 = scmp.lt.s32.totalorder %s28, 0
        %s288 = scalar_select %p287, %s28, 0
        %s289 = scalar_lea.vmem %s4, %s288
        %v290 = vld [vmem:[%s253] sm:$0xff]
        %291 = vadd.xlane.f32.xlu0 %v290
        %v292 = vpop.xlane.xlu0 %291
        %v293 = vmul.f32 %v292, 0.03125
        %v294 = vsub.f32 %v290, %v293
        %v295 = vlaneseq
        %v296 = vand.u32 %v295, 127
        %vm297 = vcmp.lt.s32.totalorder %v296, 32
        %v298 = vsel %vm297, %v294, 0.0
        %v299 = vmul.f32 %v298, %v298
        %300 = vadd.xlane.f32.xlu0 %v299
        %v301 = vpop.xlane.xlu0 %300
        %v302 = vmul.f32 %v301, 0.03125
        %v303 = vadd.f32 %v302, 1e-05
        %v304 = vrsqrt.pop %v303
        %v305 = vmul.f32 %v294, %v304
        %v306 = vld [vmem:[%s1] sm:$0x1]
        %v308 = vlaneseq
        %v309 = vshrl.u32 %v308, 7
        %v310 = vsub.s32 0, %v309
        %v311 = vrot.slane %v306, %v310
        %v313 = vmul.f32 %v305, %v311
        %v314 = vld [vmem:[%s2] sm:$0x1]
        %v316 = vlaneseq
        %v317 = vshrl.u32 %v316, 7
        %v318 = vsub.s32 0, %v317
        %v319 = vrot.slane %v314, %v318
        %v321 = vadd.f32 %v313, %v319
        %v322 = vld [vmem:[#allocation5] sm:$0xff]
        %v323 = vld [vmem:[#allocation5 + $0x8] sm:$0xff]
        %v324 = vld [vmem:[#allocation5 + $0x10] sm:$0xff]
        %v325 = vld [vmem:[#allocation5 + $0x18] sm:$0xff]
        %v326 = vld [vmem:[#allocation5 + $0x20] sm:$0xff]
        %v327 = vld [vmem:[#allocation5 + $0x28] sm:$0xff]
        %v328 = vld [vmem:[#allocation5 + $0x30] sm:$0xff]
        %v329 = vld [vmem:[#allocation5 + $0x38] sm:$0xff]
        %v330 = vld [vmem:[#allocation5 + $0x40] sm:$0xff]
        %v331 = vld [vmem:[#allocation5 + $0x48] sm:$0xff]
        %v332 = vld [vmem:[#allocation5 + $0x50] sm:$0xff]
        %v333 = vld [vmem:[#allocation5 + $0x58] sm:$0xff]
        %v334 = vld [vmem:[#allocation5 + $0x60] sm:$0xff]
        %v335 = vld [vmem:[#allocation5 + $0x68] sm:$0xff]
        %v336 = vld [vmem:[#allocation5 + $0x70] sm:$0xff]
        %v337 = vld [vmem:[#allocation5 + $0x78] sm:$0xff]
        %v338 = vld [vmem:[%s289] sm:$0x1]
        %v340 = vlaneseq
        %v341 = vshrl.u32 %v340, 7
        %v342 = vsub.s32 0, %v341
        %v343 = vrot.slane %v338, %v342
        %345 = vmatprep.subr.mxu0 0.0
        %346 = vmatpush1.msra.mxu0 %v322
        %347 = vmatprep.subr.mxu0 0.0
        %348 = vmatpush1.msra.mxu0 %v323
        %349 = vmatprep.subr.mxu0 0.0
        %350 = vmatpush1.msra.mxu0 %v324
        %351 = vmatprep.subr.mxu0 0.0
        %352 = vmatpush1.msra.mxu0 %v325
        %353 = vmatprep.subr.mxu0 0.0
        %354 = vmatpush1.msra.mxu0 %v326
        %355 = vmatprep.subr.mxu0 0.0
        %356 = vmatpush1.msra.mxu0 %v327
        %357 = vmatprep.subr.mxu0 0.0
        %358 = vmatpush1.msra.mxu0 %v328
        %359 = vmatprep.subr.mxu0 0.0
        %360 = vmatpush1.msra.mxu0 %v329
        %361 = vmatprep.subr.mxu0 0.0
        %362 = vmatpush1.msra.mxu0 %v330
        %363 = vmatprep.subr.mxu0 0.0
        %364 = vmatpush1.msra.mxu0 %v331
        %365 = vmatprep.subr.mxu0 0.0
        %366 = vmatpush1.msra.mxu0 %v332
        %367 = vmatprep.subr.mxu0 0.0
        %368 = vmatpush1.msra.mxu0 %v333
        %369 = vmatprep.subr.mxu0 0.0
        %370 = vmatpush1.msra.mxu0 %v334
        %371 = vmatprep.subr.mxu0 0.0
        %372 = vmatpush1.msra.mxu0 %v335
        %373 = vmatprep.subr.mxu0 0.0
        %374 = vmatpush1.msra.mxu0 %v336
        %375 = vmatprep.subr.mxu0 0.0
        %376 = vmatpush1.msra.mxu0 %v337
        %377 = vmatprep.subr.mxu0 0.0
        %378 = vmatpush1.msra.mxu0 0.0
        %379 = vmatprep.subr.mxu0 0.0
        %380 = vmatpush1.msra.mxu0 0.0
        %381 = vmatprep.subr.mxu0 0.0
        %382 = vmatpush1.msra.mxu0 0.0
        %383 = vmatprep.subr.mxu0 0.0
        %384 = vmatpush1.msra.mxu0 0.0
        %385 = vmatprep.subr.mxu0 0.0
        %386 = vmatpush1.msra.mxu0 0.0
        %387 = vmatprep.subr.mxu0 0.0
        %388 = vmatpush1.msra.mxu0 0.0
        %389 = vmatprep.subr.mxu0 0.0
        %390 = vmatpush1.msra.mxu0 0.0
        %391 = vmatprep.subr.mxu0 0.0
        %392 = vmatpush1.msra.mxu0 0.0
        %393 = vmatprep.subr.mxu0 0.0
        %394 = vmatpush1.msra.mxu0 0.0
        %395 = vmatprep.subr.mxu0 0.0
        %396 = vmatpush1.msra.mxu0 0.0
        %397 = vmatprep.subr.mxu0 0.0
        %398 = vmatpush1.msra.mxu0 0.0
        %399 = vmatprep.subr.mxu0 0.0
        %400 = vmatpush1.msra.mxu0 0.0
        %401 = vmatprep.subr.mxu0 0.0
        %402 = vmatpush1.msra.mxu0 0.0
        %403 = vmatprep.subr.mxu0 0.0
        %404 = vmatpush1.msra.mxu0 0.0
        %405 = vmatprep.subr.mxu0 0.0
        %406 = vmatpush1.msra.mxu0 0.0
        %407 = vmatprep.subr.mxu0 0.0
        %408 = vmatpush1.msra.mxu0 0.0
        %409 = vmatprep.mubr.f32.mxu0 0.0
        %410 = vmatmul.mubr.f32.gmra.mrb[0].mxu0 %v321
        %v411 = vpop.f32.mrb[0].mxu0
        %v412 = vadd.f32 %v343, %v411
        %v413 = vpop.f32.mrb[0].mxu0
        %414 = vdwg.mxu0
        %v415 = vadd.f32 %v412, %v290
        %416 = vst [vmem:[%s286] sm:$0xff] %v415
        %s417 = sand.u32 %s165, 1
        %s418 = scalar_lea.sflag [#allocation4], %s417
        %s419 = sand.u32 %s165, 1
        %s420 = smul.addr %s419, 8
        %s421 = scalar_lea.vmem [#allocation7], %s420
        // Predicated region
        $region49: #{tpu_custom_call.1} parent=39 // pred_check
          %p422 = pneg %p175
        $region50: #{tpu_custom_call.1} parent=39 // pred_check_branch
          %424 = sbr.rel (%p422) target = $region52
        $region51: #{tpu_custom_call.1} parent=39 // pred_region
          %s426 = ssub.s32 128, 128
          %427 = vsyncadd %s418, %s426
          %s428 = sadd.s32 %s28, %s27
          %s429 = smul.addr %s428, 128
          %s430 = scalar_lea.hbm %s5, %s429
          %s432 = sshll.u32 %s421, 4
          %s433 = int_to_ptr.vmem [resolvable:$true] %s432
          %435 = dma.vmem_to_hbm [thread:$0]  %s433, 128, %s430, %s418
        $region52: #{tpu_custom_call.1} parent=39 // pred_fallthru
          _
      $region40: #{tpu_custom_call.1} parent=5 // pred_fallthru
        _
      %p436 = scmp.le.s32.totalorder 2, %s18
      // Predicated region
      $region53: #{tpu_custom_call.1} parent=5 // pred_check
        %p437 = pneg %p436
      $region54: #{tpu_custom_call.1} parent=5 // pred_check_branch
        %439 = sbr.rel (%p437) target = $region56
      $region55: #{tpu_custom_call.1} parent=5 // pred_region
        %s440 = ssub.s32 %s18, 2
        // Predicated region
        $region57: #{tpu_custom_call.1} parent=55 // pred_check
          %p441 = pneg %p181
        $region58: #{tpu_custom_call.1} parent=55 // pred_check_branch
          %443 = sbr.rel (%p441) target = $region60
        $region59: #{tpu_custom_call.1} parent=55 // pred_region
          %s444 = sand.u32 %s166, 1
          %s445 = scalar_lea.sflag [#allocation4], %s444
          %s446 = sand.u32 %s166, 1
          %s447 = smul.addr %s446, 8
          %s448 = scalar_lea.vmem [#allocation7], %s447
          %449 = dma.done %s445, 128
        $region60: #{tpu_custom_call.1} parent=55 // pred_fallthru
          _
      $region56: #{tpu_custom_call.1} parent=5 // pred_fallthru
        _
    $region6: #{tpu_custom_call.1} parent=1 // loop_footer
      %s22 = sadd.s32 1, %s18
    $region7: #{tpu_custom_call.1} parent=1 // loop_footer_branch
      %17 = sbr.rel target = $region3
    $region8: #{tpu_custom_call.1} parent=1 // loop_exit
      _
    %450 = vsyncpa [#allocation3], 1
    %s451 = scalar_lea.sflag [#allocation3], 1
    %452 = vsyncpa %s451, 1
    %453 = vsyncpa [#allocation6], 1
    %454 = vsyncpa [#allocation4], 1
    %s455 = scalar_lea.sflag [#allocation4], 1
    %456 = vsyncpa %s455, 1

</llo_original>
